<compile_context>
chip_gen: v7x
topology: tpu7x:2x2x1
jax: 0.10.0
libtpu: 0.0.40
codegen_flags: <defaults>
</compile_context>

<pallas_src>
import functools

import jax
import jax.numpy as jnp
from jax.experimental import pallas as pl
from jax.experimental.pallas import tpu as pltpu


def _round_up(x, m):
    return (x + m - 1) // m * m


def _cdiv(a, b):
    return -(-a // b)


def actor_kernel(x_ref, w1_ref, w2_ref, w3_ref, b_ref, out_ref, *, hidden, h_pad):
    """One batch tile: fc1 -> ReLU -> fc2 -> ReLU -> fc_mean."""
    # Biases live in one packed f32 row; segments start at 128-aligned offsets.
    b1 = b_ref[:, 0:hidden]
    b2 = b_ref[:, h_pad:h_pad + hidden]
    b3 = b_ref[:, 2 * h_pad:]                      # (1, action_dim)

    x = x_ref[...]                                  # bf16 batch tile

    h1 = jnp.dot(x, w1_ref[...], preferred_element_type=jnp.float32) + b1
    h1 = jnp.maximum(h1, 0.0).astype(jnp.bfloat16)

    h2 = jnp.dot(h1, w2_ref[...], preferred_element_type=jnp.float32) + b2
    h2 = jnp.maximum(h2, 0.0).astype(jnp.bfloat16)

    mean = jnp.dot(h2, w3_ref[...], preferred_element_type=jnp.float32) + b3
    out_ref[...] = mean.astype(out_ref.dtype)


def _actor_pallas(state_p, w1_p, w2_p, w3_p, b_packed, *, n_steps, tile_b,
                  sd_pad, hidden, h_pad, action_dim, single_buffer_resident):
    """Build specs and invoke pallas_call (split out so we can retry without
    single-buffered resident operands if this build rejects Buffered(1))."""
    b_total = n_steps * tile_b

    if single_buffer_resident:
        def resident(shape):
            return pl.BlockSpec(shape, lambda i: (0, 0),
                                pipeline_mode=pl.Buffered(1))
    else:
        def resident(shape):
            return pl.BlockSpec(shape, lambda i: (0, 0))

    # VMEM footprint estimate (lane-padded), used to size vmem_limit_bytes.
    def lane(n):
        return _round_up(max(n, 1), 128)

    weights_bytes = 2 * (sd_pad * lane(hidden) + hidden * lane(hidden)
                         + hidden * lane(action_dim))
    bias_bytes = 4 * 8 * lane(2 * h_pad + action_dim)
    io_bytes = 2 * (2 * tile_b * lane(sd_pad)) + 2 * (4 * tile_b * lane(action_dim))
    inter_bytes = 6 * 4 * tile_b * lane(hidden)     # h1/h2 f32 + bf16 copies, generous
    vmem_limit = int(min(100 * 2**20,
                         max(8 * 2**20,
                             2 * (weights_bytes + bias_bytes + io_bytes + inter_bytes))))

    flops = 2 * b_total * (sd_pad * hidden + hidden * hidden + hidden * action_dim)
    bytes_accessed = (
        2 * b_total * sd_pad                                      # bf16 state in
        + 2 * (sd_pad * hidden + hidden * hidden + hidden * action_dim)  # bf16 weights
        + 4 * (2 * h_pad + action_dim)                            # packed f32 bias
        + 4 * b_total * action_dim                                # f32 output
    )

    kernel = functools.partial(actor_kernel, hidden=hidden, h_pad=h_pad)

    return pl.pallas_call(
        kernel,
        out_shape=jax.ShapeDtypeStruct((b_total, action_dim), jnp.float32),
        grid_spec=pltpu.PrefetchScalarGridSpec(
            num_scalar_prefetch=0,
            grid=(n_steps,),
            in_specs=[
                pl.BlockSpec((tile_b, sd_pad), lambda i: (i, 0)),   # state tile
                resident((sd_pad, hidden)),                          # w1 (resident)
                resident((hidden, hidden)),                          # w2 (resident)
                resident((hidden, action_dim)),                      # w3 (resident)
                resident((1, 2 * h_pad + action_dim)),               # packed biases
            ],
            out_specs=pl.BlockSpec((tile_b, action_dim), lambda i: (i, 0)),
        ),
        compiler_params=pltpu.CompilerParams(
            dimension_semantics=("parallel",),
            vmem_limit_bytes=vmem_limit,
        ),
        cost_estimate=pl.CostEstimate(
            flops=flops, transcendentals=0, bytes_accessed=bytes_accessed),
    )(state_p, w1_p, w2_p, w3_p, b_packed)


def actor_forward(state, params, *, max_tile_b=512):
    """state: [B, state_dim] float32 -> mean: [B, action_dim] float32."""
    w1, b1, w2, b2, w3, b3 = (
        params["w1"], params["b1"],
        params["w2"], params["b2"],
        params["w3"], params["b3"],
    )
    B, state_dim = state.shape
    hidden = w1.shape[1]
    action_dim = w3.shape[1]

    sd_pad = _round_up(state_dim, 8)        # sublane-align fc1's K dimension
    h_pad = _round_up(hidden, 128)          # 128-aligned bias segment offsets

    # --- batch tiling: choose the step count, then size the tile from B. ---
    b8 = _round_up(B, 8)
    n_steps = _cdiv(b8, max_tile_b)
    if b8 >= 16:
        n_steps = max(n_steps, 2)           # never grid=(1,): keep both v7x TCs busy
    if n_steps > 1 and n_steps % 2:
        n_steps += 1                        # even split across 2 TensorCores
    tile_b = _round_up(_cdiv(b8, n_steps), 8)
    b_total = n_steps * tile_b

    # --- operand preparation (one-time host-side XLA ops) -------------------
    # Zero-pad batch rows + state_dim columns, then cast MXU operands to bf16.
    state_p = jnp.zeros((b_total, sd_pad), jnp.float32)
    state_p = state_p.at[:B, :state_dim].set(state).astype(jnp.bfloat16)

    w1_p = jnp.zeros((sd_pad, hidden), jnp.float32).at[:state_dim].set(w1)
    w1_p = w1_p.astype(jnp.bfloat16)
    w2_p = w2.astype(jnp.bfloat16)
    w3_p = w3.astype(jnp.bfloat16)

    # Pack the three f32 biases into one row at 128-aligned segment offsets.
    b_packed = jnp.zeros((1, 2 * h_pad + action_dim), jnp.float32)
    b_packed = b_packed.at[:, 0:hidden].set(b1.reshape(1, hidden))
    b_packed = b_packed.at[:, h_pad:h_pad + hidden].set(b2.reshape(1, hidden))
    b_packed = b_packed.at[:, 2 * h_pad:].set(b3.reshape(1, action_dim))

    common = dict(n_steps=n_steps, tile_b=tile_b, sd_pad=sd_pad, hidden=hidden,
                  h_pad=h_pad, action_dim=action_dim)
    try:
        out = _actor_pallas(state_p, w1_p, w2_p, w3_p, b_packed,
                            single_buffer_resident=True, **common)
    except Exception:
        # Fallback if this JAX build rejects pipeline_mode=pl.Buffered(1).
        out = _actor_pallas(state_p, w1_p, w2_p, w3_p, b_packed,
                            single_buffer_resident=False, **common)

    return out[:B]


def init_actor_params(key, state_dim, action_dim, hidden=256):
    """Deterministic synthetic init (PyTorch-style uniform fan-in bounds)."""
    ks = jax.random.split(key, 6)

    def linear(kw, kb, fan_in, fan_out):
        bound = 1.0 / jnp.sqrt(fan_in)
        w = jax.random.uniform(kw, (fan_in, fan_out), jnp.float32, -bound, bound)
        b = jax.random.uniform(kb, (1, fan_out), jnp.float32, -bound, bound)
        return w, b

    w1, b1 = linear(ks[0], ks[1], state_dim, hidden)
    w2, b2 = linear(ks[2], ks[3], hidden, hidden)
    w3, b3 = linear(ks[4], ks[5], hidden, action_dim)
    return {"w1": w1, "b1": b1, "w2": w2, "b2": b2, "w3": w3, "b3": b3}


def actor_ref_f32(state, params):
    """Pure-JAX f32 reference of the PyTorch forward."""
    h = jnp.maximum(state @ params["w1"] + params["b1"], 0.0)
    h = jnp.maximum(h @ params["w2"] + params["b2"], 0.0)
    return h @ params["w3"] + params["b3"]


def actor_ref_bf16(state, params):
    """Pure-JAX reference with the same bf16-operand / f32-accumulate recipe."""
    x = state.astype(jnp.bfloat16)
    w1 = params["w1"].astype(jnp.bfloat16)
    w2 = params["w2"].astype(jnp.bfloat16)
    w3 = params["w3"].astype(jnp.bfloat16)
    h = jnp.maximum(jnp.dot(x, w1, preferred_element_type=jnp.float32)
                    + params["b1"], 0.0).astype(jnp.bfloat16)
    h = jnp.maximum(jnp.dot(h, w2, preferred_element_type=jnp.float32)
                    + params["b2"], 0.0).astype(jnp.bfloat16)
    return jnp.dot(h, w3, preferred_element_type=jnp.float32) + params["b3"]


if __name__ == "__main__":
    key = jax.random.PRNGKey(0)

    # --- small shapes consistent with the module ---
    B, state_dim, action_dim, hidden = 8, 16, 4, 32
    k_params, k_state, k2_params, k2_state = jax.random.split(key, 4)

    params = init_actor_params(k_params, state_dim, action_dim, hidden=hidden)
    state = jax.random.normal(k_state, (B, state_dim), jnp.float32)

    mean = actor_forward(state, params)
    jax.block_until_ready(mean)

    assert mean.shape == (B, action_dim)
    assert jnp.allclose(mean, actor_ref_bf16(state, params), atol=2e-2, rtol=2e-2)
    assert jnp.allclose(mean, actor_ref_f32(state, params), atol=5e-2, rtol=5e-2)

    # --- batched variant (grid > 1, unaligned B / dims, default hidden=256) ---
    B2, sd2, ad2 = 300, 17, 6
    params2 = init_actor_params(k2_params, sd2, ad2, hidden=256)
    state2 = jax.random.normal(k2_state, (B2, sd2), jnp.float32)

    mean2 = actor_forward(state2, params2)
    jax.block_until_ready(mean2)

    assert mean2.shape == (B2, ad2)
    assert jnp.allclose(mean2, actor_ref_bf16(state2, params2), atol=2e-2, rtol=2e-2)
    assert jnp.allclose(mean2, actor_ref_f32(state2, params2), atol=5e-2, rtol=5e-2)

    print("KERNEL_OK")
</pallas_src>

<mosaic_0001>
module attributes {stable_mosaic.version = 11 : i64} {
  func.func @actor_kernel(%arg0: i32, %arg1: memref<8x16xbf16, #tpu.memory_space<vmem>>, %arg2: memref<16x32xbf16, #tpu.memory_space<vmem>>, %arg3: memref<32x32xbf16, #tpu.memory_space<vmem>>, %arg4: memref<32x4xbf16, #tpu.memory_space<vmem>>, %arg5: memref<1x260xf32, #tpu.memory_space<vmem>>, %arg6: memref<8x4xf32, #tpu.memory_space<vmem>>) attributes {dimension_semantics = [#tpu.dimension_semantics<parallel>], iteration_bounds = array<i64: 1>, scalar_prefetch = 0 : i64, scratch_operands = 0 : i64, tpu.core_type = #tpu.core_type<tc>, window_params = [{transform_indices = @transform_0, window_bounds = array<i64: 8, 16>}, {pipeline_mode = #tpu.pipeline_mode<synchronous>, transform_indices = @transform_1, window_bounds = array<i64: 16, 32>}, {pipeline_mode = #tpu.pipeline_mode<synchronous>, transform_indices = @transform_2, window_bounds = array<i64: 32, 32>}, {pipeline_mode = #tpu.pipeline_mode<synchronous>, transform_indices = @transform_3, window_bounds = array<i64: 32, 4>}, {pipeline_mode = #tpu.pipeline_mode<synchronous>, transform_indices = @transform_4, window_bounds = array<i64: 1, 260>}, {transform_indices = @transform_5, window_bounds = array<i64: 8, 4>}]} {
    %c0 = arith.constant 0 : index
    %c0_0 = arith.constant 0 : index
    %0 = vector.load %arg5[%c0, %c0_0] : memref<1x260xf32, #tpu.memory_space<vmem>>, vector<1x32xf32>
    %c0_1 = arith.constant 0 : index
    %c128 = arith.constant 128 : index
    %1 = vector.load %arg5[%c0_1, %c128] : memref<1x260xf32, #tpu.memory_space<vmem>>, vector<1x32xf32>
    %c0_2 = arith.constant 0 : index
    %c256 = arith.constant 256 : index
    %2 = vector.load %arg5[%c0_2, %c256] : memref<1x260xf32, #tpu.memory_space<vmem>>, vector<1x4xf32>
    %c0_3 = arith.constant 0 : index
    %c0_4 = arith.constant 0 : index
    %3 = vector.load %arg1[%c0_3, %c0_4] : memref<8x16xbf16, #tpu.memory_space<vmem>>, vector<8x16xbf16>
    %c0_5 = arith.constant 0 : index
    %c0_6 = arith.constant 0 : index
    %4 = vector.load %arg2[%c0_5, %c0_6] : memref<16x32xbf16, #tpu.memory_space<vmem>>, vector<16x32xbf16>
    %cst = arith.constant dense<0.000000e+00> : vector<8x32xf32>
    %5 = tpu.matmul %3, %4, %cst {dimension_numbers = #tpu.dot_dimension_numbers<[1], [0], [0], [1], [0, 0, 1, 1], [], []>} : vector<8x16xbf16>, vector<16x32xbf16>, vector<8x32xf32> -> vector<8x32xf32>
    %6 = vector.broadcast %0 : vector<1x32xf32> to vector<8x32xf32>
    %7 = arith.addf %5, %6 : vector<8x32xf32>
    %cst_7 = arith.constant 0.000000e+00 : f32
    %8 = vector.broadcast %cst_7 : f32 to vector<8x32xf32>
    %9 = arith.maximumf %7, %8 : vector<8x32xf32>
    %10 = arith.truncf %9 : vector<8x32xf32> to vector<8x32xbf16>
    %c0_8 = arith.constant 0 : index
    %c0_9 = arith.constant 0 : index
    %11 = vector.load %arg3[%c0_8, %c0_9] : memref<32x32xbf16, #tpu.memory_space<vmem>>, vector<32x32xbf16>
    %cst_10 = arith.constant dense<0.000000e+00> : vector<8x32xf32>
    %12 = tpu.matmul %10, %11, %cst_10 {dimension_numbers = #tpu.dot_dimension_numbers<[1], [0], [0], [1], [0, 0, 1, 1], [], []>} : vector<8x32xbf16>, vector<32x32xbf16>, vector<8x32xf32> -> vector<8x32xf32>
    %13 = vector.broadcast %1 : vector<1x32xf32> to vector<8x32xf32>
    %14 = arith.addf %12, %13 : vector<8x32xf32>
    %cst_11 = arith.constant 0.000000e+00 : f32
    %15 = vector.broadcast %cst_11 : f32 to vector<8x32xf32>
    %16 = arith.maximumf %14, %15 : vector<8x32xf32>
    %17 = arith.truncf %16 : vector<8x32xf32> to vector<8x32xbf16>
    %c0_12 = arith.constant 0 : index
    %c0_13 = arith.constant 0 : index
    %18 = vector.load %arg4[%c0_12, %c0_13] : memref<32x4xbf16, #tpu.memory_space<vmem>>, vector<32x4xbf16>
    %cst_14 = arith.constant dense<0.000000e+00> : vector<8x4xf32>
    %19 = tpu.matmul %17, %18, %cst_14 {dimension_numbers = #tpu.dot_dimension_numbers<[1], [0], [0], [1], [0, 0, 1, 1], [], []>} : vector<8x32xbf16>, vector<32x4xbf16>, vector<8x4xf32> -> vector<8x4xf32>
    %20 = vector.broadcast %2 : vector<1x4xf32> to vector<8x4xf32>
    %21 = arith.addf %19, %20 : vector<8x4xf32>
    %c0_15 = arith.constant 0 : index
    %c0_16 = arith.constant 0 : index
    %22 = vector.load %arg6[%c0_15, %c0_16] : memref<8x4xf32, #tpu.memory_space<vmem>>, vector<8x4xf32>
    tpu.vector_store %arg6[%c0_15, %c0_16], %21 {strides = array<i32>} : memref<8x4xf32, #tpu.memory_space<vmem>>, vector<8x4xf32>,
    return
  }
  func.func @transform_0(%arg0: i32) -> (i32, i32) {
    %c0_i32 = arith.constant 0 : i32
    %c0_i32_0 = arith.constant 0 : i32
    return %arg0, %c0_i32 : i32, i32
  }
  func.func @transform_1(%arg0: i32) -> (i32, i32) {
    %c0_i32 = arith.constant 0 : i32
    %c0_i32_0 = arith.constant 0 : i32
    %c0_i32_1 = arith.constant 0 : i32
    return %c0_i32, %c0_i32_0 : i32, i32
  }
  func.func @transform_2(%arg0: i32) -> (i32, i32) {
    %c0_i32 = arith.constant 0 : i32
    %c0_i32_0 = arith.constant 0 : i32
    %c0_i32_1 = arith.constant 0 : i32
    return %c0_i32, %c0_i32_0 : i32, i32
  }
  func.func @transform_3(%arg0: i32) -> (i32, i32) {
    %c0_i32 = arith.constant 0 : i32
    %c0_i32_0 = arith.constant 0 : i32
    %c0_i32_1 = arith.constant 0 : i32
    return %c0_i32, %c0_i32_0 : i32, i32
  }
  func.func @transform_4(%arg0: i32) -> (i32, i32) {
    %c0_i32 = arith.constant 0 : i32
    %c0_i32_0 = arith.constant 0 : i32
    %c0_i32_1 = arith.constant 0 : i32
    return %c0_i32, %c0_i32_0 : i32, i32
  }
  func.func @transform_5(%arg0: i32) -> (i32, i32) {
    %c0_i32 = arith.constant 0 : i32
    %c0_i32_0 = arith.constant 0 : i32
    return %arg0, %c0_i32 : i32, i32
  }
}

module attributes {stable_mosaic.version = 11 : i64} {
  func.func @actor_kernel(%arg0: i32, %arg1: memref<8x16xbf16, #tpu.memory_space<vmem>>, %arg2: memref<16x32xbf16, #tpu.memory_space<vmem>>, %arg3: memref<32x32xbf16, #tpu.memory_space<vmem>>, %arg4: memref<32x4xbf16, #tpu.memory_space<vmem>>, %arg5: memref<1x260xf32, #tpu.memory_space<vmem>>, %arg6: memref<8x4xf32, #tpu.memory_space<vmem>>) attributes {dimension_semantics = [#tpu.dimension_semantics<parallel>], iteration_bounds = array<i64: 1>, scalar_prefetch = 0 : i64, scratch_operands = 0 : i64, tpu.core_type = #tpu.core_type<tc>, window_params = [{transform_indices = @transform_0, window_bounds = array<i64: 8, 16>}, {pipeline_mode = #tpu.pipeline_mode<synchronous>, transform_indices = @transform_1, window_bounds = array<i64: 16, 32>}, {pipeline_mode = #tpu.pipeline_mode<synchronous>, transform_indices = @transform_2, window_bounds = array<i64: 32, 32>}, {pipeline_mode = #tpu.pipeline_mode<synchronous>, transform_indices = @transform_3, window_bounds = array<i64: 32, 4>}, {pipeline_mode = #tpu.pipeline_mode<synchronous>, transform_indices = @transform_4, window_bounds = array<i64: 1, 260>}, {transform_indices = @transform_5, window_bounds = array<i64: 8, 4>}]} {
    %c0 = arith.constant 0 : index
    %c0_0 = arith.constant 0 : index
    %0 = vector.load %arg5[%c0, %c0_0] : memref<1x260xf32, #tpu.memory_space<vmem>>, vector<1x32xf32>
    %c0_1 = arith.constant 0 : index
    %c128 = arith.constant 128 : index
    %1 = vector.load %arg5[%c0_1, %c128] : memref<1x260xf32, #tpu.memory_space<vmem>>, vector<1x32xf32>
    %c0_2 = arith.constant 0 : index
    %c256 = arith.constant 256 : index
    %2 = vector.load %arg5[%c0_2, %c256] : memref<1x260xf32, #tpu.memory_space<vmem>>, vector<1x4xf32>
    %c0_3 = arith.constant 0 : index
    %c0_4 = arith.constant 0 : index
    %3 = vector.load %arg1[%c0_3, %c0_4] : memref<8x16xbf16, #tpu.memory_space<vmem>>, vector<8x16xbf16>
    %c0_5 = arith.constant 0 : index
    %c0_6 = arith.constant 0 : index
    %4 = vector.load %arg2[%c0_5, %c0_6] : memref<16x32xbf16, #tpu.memory_space<vmem>>, vector<16x32xbf16>
    %cst = arith.constant dense<0.000000e+00> : vector<8x32xf32>
    %5 = tpu.matmul %3, %4, %cst {dimension_numbers = #tpu.dot_dimension_numbers<[1], [0], [0], [1], [0, 0, 1, 1], [], []>} : vector<8x16xbf16>, vector<16x32xbf16>, vector<8x32xf32> -> vector<8x32xf32>
    %6 = vector.broadcast %0 : vector<1x32xf32> to vector<8x32xf32>
    %7 = arith.addf %5, %6 : vector<8x32xf32>
    %cst_7 = arith.constant 0.000000e+00 : f32
    %8 = vector.broadcast %cst_7 : f32 to vector<8x32xf32>
    %9 = arith.maximumf %7, %8 : vector<8x32xf32>
    %10 = arith.truncf %9 : vector<8x32xf32> to vector<8x32xbf16>
    %c0_8 = arith.constant 0 : index
    %c0_9 = arith.constant 0 : index
    %11 = vector.load %arg3[%c0_8, %c0_9] : memref<32x32xbf16, #tpu.memory_space<vmem>>, vector<32x32xbf16>
    %cst_10 = arith.constant dense<0.000000e+00> : vector<8x32xf32>
    %12 = tpu.matmul %10, %11, %cst_10 {dimension_numbers = #tpu.dot_dimension_numbers<[1], [0], [0], [1], [0, 0, 1, 1], [], []>} : vector<8x32xbf16>, vector<32x32xbf16>, vector<8x32xf32> -> vector<8x32xf32>
    %13 = vector.broadcast %1 : vector<1x32xf32> to vector<8x32xf32>
    %14 = arith.addf %12, %13 : vector<8x32xf32>
    %cst_11 = arith.constant 0.000000e+00 : f32
    %15 = vector.broadcast %cst_11 : f32 to vector<8x32xf32>
    %16 = arith.maximumf %14, %15 : vector<8x32xf32>
    %17 = arith.truncf %16 : vector<8x32xf32> to vector<8x32xbf16>
    %c0_12 = arith.constant 0 : index
    %c0_13 = arith.constant 0 : index
    %18 = vector.load %arg4[%c0_12, %c0_13] : memref<32x4xbf16, #tpu.memory_space<vmem>>, vector<32x4xbf16>
    %cst_14 = arith.constant dense<0.000000e+00> : vector<8x4xf32>
    %19 = tpu.matmul %17, %18, %cst_14 {dimension_numbers = #tpu.dot_dimension_numbers<[1], [0], [0], [1], [0, 0, 1, 1], [], []>} : vector<8x32xbf16>, vector<32x4xbf16>, vector<8x4xf32> -> vector<8x4xf32>
    %20 = vector.broadcast %2 : vector<1x4xf32> to vector<8x4xf32>
    %21 = arith.addf %19, %20 : vector<8x4xf32>
    %c0_15 = arith.constant 0 : index
    %c0_16 = arith.constant 0 : index
    %22 = vector.load %arg6[%c0_15, %c0_16] : memref<8x4xf32, #tpu.memory_space<vmem>>, vector<8x4xf32>
    tpu.vector_store %arg6[%c0_15, %c0_16], %21 {strides = array<i32>} : memref<8x4xf32, #tpu.memory_space<vmem>>, vector<8x4xf32>,
    return
  }
  func.func @transform_0(%arg0: i32) -> (i32, i32) {
    %c0_i32 = arith.constant 0 : i32
    %c0_i32_0 = arith.constant 0 : i32
    return %arg0, %c0_i32 : i32, i32
  }
  func.func @transform_1(%arg0: i32) -> (i32, i32) {
    %c0_i32 = arith.constant 0 : i32
    %c0_i32_0 = arith.constant 0 : i32
    %c0_i32_1 = arith.constant 0 : i32
    return %c0_i32, %c0_i32_0 : i32, i32
  }
  func.func @transform_2(%arg0: i32) -> (i32, i32) {
    %c0_i32 = arith.constant 0 : i32
    %c0_i32_0 = arith.constant 0 : i32
    %c0_i32_1 = arith.constant 0 : i32
    return %c0_i32, %c0_i32_0 : i32, i32
  }
  func.func @transform_3(%arg0: i32) -> (i32, i32) {
    %c0_i32 = arith.constant 0 : i32
    %c0_i32_0 = arith.constant 0 : i32
    %c0_i32_1 = arith.constant 0 : i32
    return %c0_i32, %c0_i32_0 : i32, i32
  }
  func.func @transform_4(%arg0: i32) -> (i32, i32) {
    %c0_i32 = arith.constant 0 : i32
    %c0_i32_0 = arith.constant 0 : i32
    %c0_i32_1 = arith.constant 0 : i32
    return %c0_i32, %c0_i32_0 : i32, i32
  }
  func.func @transform_5(%arg0: i32) -> (i32, i32) {
    %c0_i32 = arith.constant 0 : i32
    %c0_i32_0 = arith.constant 0 : i32
    return %arg0, %c0_i32 : i32, i32
  }
}

</mosaic_0001>

<llo_original>
// kernel: tpu_custom_call.1
$region0: #{tpu_custom_call.1}
  #allocation0 [shape = 'u32[]', space=smem, size = 0x4, offset = 0x4, fixed_abs, tag = 'smem constant byte address 0x4 - core index']
  #allocation1 [shape = 'u32[144,128]{1,0:T(1,128)}', space=vmem, size = 0x12000, scoped, tag = 'internal scratch']
  %s0 = inlined_call_operand.hbm [shape: bf16[8,16], index: 0, kind: input, shape index: {}]
  %s1 = inlined_call_operand.vmem [shape: bf16[16,32], index: 1, kind: input, shape index: {}]
  %s2 = inlined_call_operand.vmem [shape: bf16[32,32], index: 2, kind: input, shape index: {}]
  %s3 = inlined_call_operand.vmem [shape: bf16[32,4], index: 3, kind: input, shape index: {}]
  %s4 = inlined_call_operand.vmem [shape: f32[1,260], index: 4, kind: input, shape index: {}]
  %s5 = inlined_call_operand.vmem [shape: f32[8,4], index: 5, kind: output, shape index: {}]
  %s6 = sld [smem:[#allocation0]]
  $region34: #{tpu_custom_call.1} parent=0
    _
  %s8 = ssub.s32 1, %s6
  %s9 = scalar_select 0, %s8, %s6
  $region1: #{tpu_custom_call.1} parent=0
    #allocation2 [shape = 'u8[2048]{0}', space=vmem, size = 0x800, scoped, tag = 'input window, operand 0, single buffered']
    #allocation3 [shape = 's32[1]{0}', space=sflag, size = 0x4, scoped, tag = 'scoped memory for tpu_custom_call.1']
    %10 = vsyncpa [#allocation3], 0
    // Predicated region
    $region2: #{tpu_custom_call.1} parent=1 // pred_check
      _
    $region3: #{tpu_custom_call.1} parent=1 // pred_check_branch
      %12 = sbr.rel (0) target = $region5
    $region4: #{tpu_custom_call.1} parent=1 // pred_region
      %s14 = ssub.s32 64, 64
      %15 = vsyncadd [#allocation3], %s14
      %s17 = sshll.u32 [#allocation2], 4
      %s18 = int_to_ptr.vmem [resolvable:$true] %s17
      %20 = dma.hbm_to_vmem [thread:$0]  %s0, 64, %s18, [#allocation3]
    $region5: #{tpu_custom_call.1} parent=1 // pred_fallthru
      _
    // Predicated region
    $region6: #{tpu_custom_call.1} parent=1 // pred_check
      _
    $region7: #{tpu_custom_call.1} parent=1 // pred_check_branch
      %22 = sbr.rel (0) target = $region9
    $region8: #{tpu_custom_call.1} parent=1 // pred_region
      _
    $region9: #{tpu_custom_call.1} parent=1 // pred_fallthru
      _
    // Predicated region
    $region10: #{tpu_custom_call.1} parent=1 // pred_check
      _
    $region11: #{tpu_custom_call.1} parent=1 // pred_check_branch
      %24 = sbr.rel (0) target = $region13
    $region12: #{tpu_custom_call.1} parent=1 // pred_region
      _
    $region13: #{tpu_custom_call.1} parent=1 // pred_fallthru
      _
    // Predicated region
    $region14: #{tpu_custom_call.1} parent=1 // pred_check
      _
    $region15: #{tpu_custom_call.1} parent=1 // pred_check_branch
      %26 = sbr.rel (0) target = $region17
    $region16: #{tpu_custom_call.1} parent=1 // pred_region
      _
    $region17: #{tpu_custom_call.1} parent=1 // pred_fallthru
      _
    // Predicated region
    $region18: #{tpu_custom_call.1} parent=1 // pred_check
      _
    $region19: #{tpu_custom_call.1} parent=1 // pred_check_branch
      %28 = sbr.rel (0) target = $region21
    $region20: #{tpu_custom_call.1} parent=1 // pred_region
      _
    $region21: #{tpu_custom_call.1} parent=1 // pred_fallthru
      _
    // Predicated region
    $region22: #{tpu_custom_call.1} parent=1 // pred_check
      _
    $region23: #{tpu_custom_call.1} parent=1 // pred_check_branch
      %30 = sbr.rel (0) target = $region25
    $region24: #{tpu_custom_call.1} parent=1 // pred_region
      %31 = dma.done [#allocation3], 64
    $region25: #{tpu_custom_call.1} parent=1 // pred_fallthru
      _
    %v33 = vld [vmem:[%s4] sm:$0x1]
    %v34 = vld [vmem:[%s4 + $0x1] sm:$0x1]
    %v35 = vld [vmem:[%s4 + $0x2] sm:$0x1]
    %v36 = vld [vmem:[#allocation2] sm:$0xf]
    %v37 = vld [vmem:[%s1] sm:$0xf]
    %v38 = vld [vmem:[%s1 + $0x4] sm:$0xf]
    %v40 = vlaneseq
    %v41 = vshrl.u32 %v40, 7
    %v42 = vsub.s32 0, %v41
    %v43 = vrot.slane %v33, %v42
    %v47 = vunpack.c.l.b16 %v37
    %v48 = vunpack.c.l.b16 %v38
    %v49 = vpack.c.b16 %v48, %v47
    %vm51 = vcmask 130048
    %v53 = vsel %vm51, %v36, 0
    %55 = vmatprep.subr.bf16.mxu0 0
    %56 = vmatpush1.bf16.msra.mxu0 %v49
    %57 = vmatprep.subr.bf16.mxu0 0
    %58 = vmatpush1.bf16.msra.mxu0 0
    %59 = vmatprep.subr.bf16.mxu0 0
    %60 = vmatpush1.bf16.msra.mxu0 0
    %61 = vmatprep.subr.bf16.mxu0 0
    %62 = vmatpush1.bf16.msra.mxu0 0
    %63 = vmatprep.subr.bf16.mxu0 0
    %64 = vmatpush1.bf16.msra.mxu0 0
    %65 = vmatprep.subr.bf16.mxu0 0
    %66 = vmatpush1.bf16.msra.mxu0 0
    %67 = vmatprep.subr.bf16.mxu0 0
    %68 = vmatpush1.bf16.msra.mxu0 0
    %69 = vmatprep.subr.bf16.mxu0 0
    %70 = vmatpush1.bf16.msra.mxu0 0
    %71 = vmatprep.subr.bf16.mxu0 0
    %72 = vmatpush1.bf16.msra.mxu0 0
    %73 = vmatprep.subr.bf16.mxu0 0
    %74 = vmatpush1.bf16.msra.mxu0 0
    %75 = vmatprep.subr.bf16.mxu0 0
    %76 = vmatpush1.bf16.msra.mxu0 0
    %77 = vmatprep.subr.bf16.mxu0 0
    %78 = vmatpush1.bf16.msra.mxu0 0
    %79 = vmatprep.subr.bf16.mxu0 0
    %80 = vmatpush1.bf16.msra.mxu0 0
    %81 = vmatprep.subr.bf16.mxu0 0
    %82 = vmatpush1.bf16.msra.mxu0 0
    %83 = vmatprep.subr.bf16.mxu0 0
    %84 = vmatpush1.bf16.msra.mxu0 0
    %85 = vmatprep.subr.bf16.mxu0 0
    %86 = vmatpush1.bf16.msra.mxu0 0
    %87 = vmatprep.mubr.bf16.mxu0 0
    %88 = vmatmul.mubr.bf16.gmra.mrb[0].mxu0 %v53
    %v89 = vpop.f32.mrb[0].mxu0
    %v90 = vadd.f32 %v43, %v89
    %v91 = vpop.f32.mrb[0].mxu0
    %v92 = vpop.f32.mrb[0].mxu0
    %v93 = vpop.f32.mrb[0].mxu0
    %94 = vdwg.mxu0
    %v95 = vmax.f32 %v90, 0.0
    %v96 = vpack.c.bf16 %v95, %v95
    %v97 = vld [vmem:[%s2] sm:$0xf]
    %v98 = vld [vmem:[%s2 + $0x4] sm:$0xf]
    %v99 = vld [vmem:[%s2 + $0x8] sm:$0xf]
    %v100 = vld [vmem:[%s2 + $0xc] sm:$0xf]
    %v102 = vlaneseq
    %v103 = vshrl.u32 %v102, 7
    %v104 = vsub.s32 0, %v103
    %v105 = vrot.slane %v34, %v104
    %v111 = vunpack.c.l.b16 %v97
    %v112 = vunpack.c.l.b16 %v98
    %v113 = vunpack.c.l.b16 %v99
    %v114 = vunpack.c.l.b16 %v100
    %v115 = vpack.c.b16 %v112, %v111
    %v116 = vpack.c.b16 %v114, %v113
    %vm119 = vcmask 261120
    %v121 = vsel %vm119, %v96, 0
    %123 = vmatprep.subr.bf16.mxu0 0
    %124 = vmatpush1.bf16.msra.mxu0 %v115
    %125 = vmatprep.subr.bf16.mxu0 0
    %126 = vmatpush1.bf16.msra.mxu0 %v116
    %127 = vmatprep.subr.bf16.mxu0 0
    %128 = vmatpush1.bf16.msra.mxu0 0
    %129 = vmatprep.subr.bf16.mxu0 0
    %130 = vmatpush1.bf16.msra.mxu0 0
    %131 = vmatprep.subr.bf16.mxu0 0
    %132 = vmatpush1.bf16.msra.mxu0 0
    %133 = vmatprep.subr.bf16.mxu0 0
    %134 = vmatpush1.bf16.msra.mxu0 0
    %135 = vmatprep.subr.bf16.mxu0 0
    %136 = vmatpush1.bf16.msra.mxu0 0
    %137 = vmatprep.subr.bf16.mxu0 0
    %138 = vmatpush1.bf16.msra.mxu0 0
    %139 = vmatprep.subr.bf16.mxu0 0
    %140 = vmatpush1.bf16.msra.mxu0 0
    %141 = vmatprep.subr.bf16.mxu0 0
    %142 = vmatpush1.bf16.msra.mxu0 0
    %143 = vmatprep.subr.bf16.mxu0 0
    %144 = vmatpush1.bf16.msra.mxu0 0
    %145 = vmatprep.subr.bf16.mxu0 0
    %146 = vmatpush1.bf16.msra.mxu0 0
    %147 = vmatprep.subr.bf16.mxu0 0
    %148 = vmatpush1.bf16.msra.mxu0 0
    %149 = vmatprep.subr.bf16.mxu0 0
    %150 = vmatpush1.bf16.msra.mxu0 0
    %151 = vmatprep.subr.bf16.mxu0 0
    %152 = vmatpush1.bf16.msra.mxu0 0
    %153 = vmatprep.subr.bf16.mxu0 0
    %154 = vmatpush1.bf16.msra.mxu0 0
    %155 = vmatprep.mubr.bf16.mxu0 0
    %156 = vmatmul.mubr.bf16.gmra.mrb[0].mxu0 %v121
    %v157 = vpop.f32.mrb[0].mxu0
    %v158 = vadd.f32 %v105, %v157
    %v159 = vpop.f32.mrb[0].mxu0
    %v160 = vpop.f32.mrb[0].mxu0
    %v161 = vpop.f32.mrb[0].mxu0
    %162 = vdwg.mxu0
    %v163 = vmax.f32 %v158, 0.0
    %v164 = vpack.c.bf16 %v163, %v163
    %v165 = vld [vmem:[%s3] sm:$0xf]
    %v166 = vld [vmem:[%s3 + $0x4] sm:$0xf]
    %v167 = vld [vmem:[%s3 + $0x8] sm:$0xf]
    %v168 = vld [vmem:[%s3 + $0xc] sm:$0xf]
    %v170 = vlaneseq
    %v171 = vshrl.u32 %v170, 7
    %v172 = vsub.s32 0, %v171
    %v173 = vrot.slane %v35, %v172
    %v179 = vunpack.c.l.b16 %v165
    %v180 = vunpack.c.l.b16 %v166
    %v181 = vunpack.c.l.b16 %v167
    %v182 = vunpack.c.l.b16 %v168
    %v183 = vpack.c.b16 %v180, %v179
    %v184 = vpack.c.b16 %v182, %v181
    %v188 = vsel %vm119, %v164, 0
    %190 = vmatprep.subr.bf16.mxu0 0
    %191 = vmatpush1.bf16.msra.mxu0 %v183
    %192 = vmatprep.subr.bf16.mxu0 0
    %193 = vmatpush1.bf16.msra.mxu0 %v184
    %194 = vmatprep.subr.bf16.mxu0 0
    %195 = vmatpush1.bf16.msra.mxu0 0
    %196 = vmatprep.subr.bf16.mxu0 0
    %197 = vmatpush1.bf16.msra.mxu0 0
    %198 = vmatprep.subr.bf16.mxu0 0
    %199 = vmatpush1.bf16.msra.mxu0 0
    %200 = vmatprep.subr.bf16.mxu0 0
    %201 = vmatpush1.bf16.msra.mxu0 0
    %202 = vmatprep.subr.bf16.mxu0 0
    %203 = vmatpush1.bf16.msra.mxu0 0
    %204 = vmatprep.subr.bf16.mxu0 0
    %205 = vmatpush1.bf16.msra.mxu0 0
    %206 = vmatprep.subr.bf16.mxu0 0
    %207 = vmatpush1.bf16.msra.mxu0 0
    %208 = vmatprep.subr.bf16.mxu0 0
    %209 = vmatpush1.bf16.msra.mxu0 0
    %210 = vmatprep.subr.bf16.mxu0 0
    %211 = vmatpush1.bf16.msra.mxu0 0
    %212 = vmatprep.subr.bf16.mxu0 0
    %213 = vmatpush1.bf16.msra.mxu0 0
    %214 = vmatprep.subr.bf16.mxu0 0
    %215 = vmatpush1.bf16.msra.mxu0 0
    %216 = vmatprep.subr.bf16.mxu0 0
    %217 = vmatpush1.bf16.msra.mxu0 0
    %218 = vmatprep.subr.bf16.mxu0 0
    %219 = vmatpush1.bf16.msra.mxu0 0
    %220 = vmatprep.subr.bf16.mxu0 0
    %221 = vmatpush1.bf16.msra.mxu0 0
    %222 = vmatprep.mubr.bf16.mxu0 0
    %223 = vmatmul.mubr.bf16.gmra.mrb[0].mxu0 %v188
    %v224 = vpop.f32.mrb[0].mxu0
    %v225 = vadd.f32 %v173, %v224
    %v226 = vpop.f32.mrb[0].mxu0
    %v227 = vpop.f32.mrb[0].mxu0
    %v228 = vpop.f32.mrb[0].mxu0
    %229 = vdwg.mxu0
    %vm230 = vcmask 31744
    %231 = vst.msk [vmem:[%s5] sm:$0xff] %vm230, %v225
    // Predicated region
    $region26: #{tpu_custom_call.1} parent=1 // pred_check
      _
    $region27: #{tpu_custom_call.1} parent=1 // pred_check_branch
      %233 = sbr.rel (0) target = $region29
    $region28: #{tpu_custom_call.1} parent=1 // pred_region
      _
    $region29: #{tpu_custom_call.1} parent=1 // pred_fallthru
      _
    // Predicated region
    $region30: #{tpu_custom_call.1} parent=1 // pred_check
      _
    $region31: #{tpu_custom_call.1} parent=1 // pred_check_branch
      %235 = sbr.rel (0) target = $region33
    $region32: #{tpu_custom_call.1} parent=1 // pred_region
      _
    $region33: #{tpu_custom_call.1} parent=1 // pred_fallthru
      _
    %236 = vsyncpa [#allocation3], 1

// kernel: tpu_custom_call.1
$region0: #{tpu_custom_call.1}
  #allocation0 [shape = 'u32[]', space=smem, size = 0x4, offset = 0x4, fixed_abs, tag = 'smem constant byte address 0x4 - core index']
  #allocation1 [shape = 'u32[144,128]{1,0:T(1,128)}', space=vmem, size = 0x12000, scoped, tag = 'internal scratch']
  %s0 = inlined_call_operand.hbm [shape: bf16[8,16], index: 0, kind: input, shape index: {}]
  %s1 = inlined_call_operand.vmem [shape: bf16[16,32], index: 1, kind: input, shape index: {}]
  %s2 = inlined_call_operand.vmem [shape: bf16[32,32], index: 2, kind: input, shape index: {}]
  %s3 = inlined_call_operand.vmem [shape: bf16[32,4], index: 3, kind: input, shape index: {}]
  %s4 = inlined_call_operand.vmem [shape: f32[1,260], index: 4, kind: input, shape index: {}]
  %s5 = inlined_call_operand.vmem [shape: f32[8,4], index: 5, kind: output, shape index: {}]
  %s6 = sld [smem:[#allocation0]]
  $region34: #{tpu_custom_call.1} parent=0
    _
  %s8 = ssub.s32 1, %s6
  %s9 = scalar_select 0, %s8, %s6
  $region1: #{tpu_custom_call.1} parent=0
    #allocation2 [shape = 'u8[2048]{0}', space=vmem, size = 0x800, scoped, tag = 'input window, operand 0, single buffered']
    #allocation3 [shape = 's32[1]{0}', space=sflag, size = 0x4, scoped, tag = 'scoped memory for tpu_custom_call.1']
    %10 = vsyncpa [#allocation3], 0
    // Predicated region
    $region2: #{tpu_custom_call.1} parent=1 // pred_check
      _
    $region3: #{tpu_custom_call.1} parent=1 // pred_check_branch
      %12 = sbr.rel (0) target = $region5
    $region4: #{tpu_custom_call.1} parent=1 // pred_region
      %s14 = ssub.s32 64, 64
      %15 = vsyncadd [#allocation3], %s14
      %s17 = sshll.u32 [#allocation2], 4
      %s18 = int_to_ptr.vmem [resolvable:$true] %s17
      %20 = dma.hbm_to_vmem [thread:$0]  %s0, 64, %s18, [#allocation3]
    $region5: #{tpu_custom_call.1} parent=1 // pred_fallthru
      _
    // Predicated region
    $region6: #{tpu_custom_call.1} parent=1 // pred_check
      _
    $region7: #{tpu_custom_call.1} parent=1 // pred_check_branch
      %22 = sbr.rel (0) target = $region9
    $region8: #{tpu_custom_call.1} parent=1 // pred_region
      _
    $region9: #{tpu_custom_call.1} parent=1 // pred_fallthru
      _
    // Predicated region
    $region10: #{tpu_custom_call.1} parent=1 // pred_check
      _
    $region11: #{tpu_custom_call.1} parent=1 // pred_check_branch
      %24 = sbr.rel (0) target = $region13
    $region12: #{tpu_custom_call.1} parent=1 // pred_region
      _
    $region13: #{tpu_custom_call.1} parent=1 // pred_fallthru
      _
    // Predicated region
    $region14: #{tpu_custom_call.1} parent=1 // pred_check
      _
    $region15: #{tpu_custom_call.1} parent=1 // pred_check_branch
      %26 = sbr.rel (0) target = $region17
    $region16: #{tpu_custom_call.1} parent=1 // pred_region
      _
    $region17: #{tpu_custom_call.1} parent=1 // pred_fallthru
      _
    // Predicated region
    $region18: #{tpu_custom_call.1} parent=1 // pred_check
      _
    $region19: #{tpu_custom_call.1} parent=1 // pred_check_branch
      %28 = sbr.rel (0) target = $region21
    $region20: #{tpu_custom_call.1} parent=1 // pred_region
      _
    $region21: #{tpu_custom_call.1} parent=1 // pred_fallthru
      _
    // Predicated region
    $region22: #{tpu_custom_call.1} parent=1 // pred_check
      _
    $region23: #{tpu_custom_call.1} parent=1 // pred_check_branch
      %30 = sbr.rel (0) target = $region25
    $region24: #{tpu_custom_call.1} parent=1 // pred_region
      %31 = dma.done [#allocation3], 64
    $region25: #{tpu_custom_call.1} parent=1 // pred_fallthru
      _
    %v33 = vld [vmem:[%s4] sm:$0x1]
    %v34 = vld [vmem:[%s4 + $0x1] sm:$0x1]
    %v35 = vld [vmem:[%s4 + $0x2] sm:$0x1]
    %v36 = vld [vmem:[#allocation2] sm:$0xf]
    %v37 = vld [vmem:[%s1] sm:$0xf]
    %v38 = vld [vmem:[%s1 + $0x4] sm:$0xf]
    %v40 = vlaneseq
    %v41 = vshrl.u32 %v40, 7
    %v42 = vsub.s32 0, %v41
    %v43 = vrot.slane %v33, %v42
    %v47 = vunpack.c.l.b16 %v37
    %v48 = vunpack.c.l.b16 %v38
    %v49 = vpack.c.b16 %v48, %v47
    %vm51 = vcmask 130048
    %v53 = vsel %vm51, %v36, 0
    %55 = vmatprep.subr.bf16.mxu0 0
    %56 = vmatpush1.bf16.msra.mxu0 %v49
    %57 = vmatprep.subr.bf16.mxu0 0
    %58 = vmatpush1.bf16.msra.mxu0 0
    %59 = vmatprep.subr.bf16.mxu0 0
    %60 = vmatpush1.bf16.msra.mxu0 0
    %61 = vmatprep.subr.bf16.mxu0 0
    %62 = vmatpush1.bf16.msra.mxu0 0
    %63 = vmatprep.subr.bf16.mxu0 0
    %64 = vmatpush1.bf16.msra.mxu0 0
    %65 = vmatprep.subr.bf16.mxu0 0
    %66 = vmatpush1.bf16.msra.mxu0 0
    %67 = vmatprep.subr.bf16.mxu0 0
    %68 = vmatpush1.bf16.msra.mxu0 0
    %69 = vmatprep.subr.bf16.mxu0 0
    %70 = vmatpush1.bf16.msra.mxu0 0
    %71 = vmatprep.subr.bf16.mxu0 0
    %72 = vmatpush1.bf16.msra.mxu0 0
    %73 = vmatprep.subr.bf16.mxu0 0
    %74 = vmatpush1.bf16.msra.mxu0 0
    %75 = vmatprep.subr.bf16.mxu0 0
    %76 = vmatpush1.bf16.msra.mxu0 0
    %77 = vmatprep.subr.bf16.mxu0 0
    %78 = vmatpush1.bf16.msra.mxu0 0
    %79 = vmatprep.subr.bf16.mxu0 0
    %80 = vmatpush1.bf16.msra.mxu0 0
    %81 = vmatprep.subr.bf16.mxu0 0
    %82 = vmatpush1.bf16.msra.mxu0 0
    %83 = vmatprep.subr.bf16.mxu0 0
    %84 = vmatpush1.bf16.msra.mxu0 0
    %85 = vmatprep.subr.bf16.mxu0 0
    %86 = vmatpush1.bf16.msra.mxu0 0
    %87 = vmatprep.mubr.bf16.mxu0 0
    %88 = vmatmul.mubr.bf16.gmra.mrb[0].mxu0 %v53
    %v89 = vpop.f32.mrb[0].mxu0
    %v90 = vadd.f32 %v43, %v89
    %v91 = vpop.f32.mrb[0].mxu0
    %v92 = vpop.f32.mrb[0].mxu0
    %v93 = vpop.f32.mrb[0].mxu0
    %94 = vdwg.mxu0
    %v95 = vmax.f32 %v90, 0.0
    %v96 = vpack.c.bf16 %v95, %v95
    %v97 = vld [vmem:[%s2] sm:$0xf]
    %v98 = vld [vmem:[%s2 + $0x4] sm:$0xf]
    %v99 = vld [vmem:[%s2 + $0x8] sm:$0xf]
    %v100 = vld [vmem:[%s2 + $0xc] sm:$0xf]
    %v102 = vlaneseq
    %v103 = vshrl.u32 %v102, 7
    %v104 = vsub.s32 0, %v103
    %v105 = vrot.slane %v34, %v104
    %v111 = vunpack.c.l.b16 %v97
    %v112 = vunpack.c.l.b16 %v98
    %v113 = vunpack.c.l.b16 %v99
    %v114 = vunpack.c.l.b16 %v100
    %v115 = vpack.c.b16 %v112, %v111
    %v116 = vpack.c.b16 %v114, %v113
    %vm119 = vcmask 261120
    %v121 = vsel %vm119, %v96, 0
    %123 = vmatprep.subr.bf16.mxu0 0
    %124 = vmatpush1.bf16.msra.mxu0 %v115
    %125 = vmatprep.subr.bf16.mxu0 0
    %126 = vmatpush1.bf16.msra.mxu0 %v116
    %127 = vmatprep.subr.bf16.mxu0 0
    %128 = vmatpush1.bf16.msra.mxu0 0
    %129 = vmatprep.subr.bf16.mxu0 0
    %130 = vmatpush1.bf16.msra.mxu0 0
    %131 = vmatprep.subr.bf16.mxu0 0
    %132 = vmatpush1.bf16.msra.mxu0 0
    %133 = vmatprep.subr.bf16.mxu0 0
    %134 = vmatpush1.bf16.msra.mxu0 0
    %135 = vmatprep.subr.bf16.mxu0 0
    %136 = vmatpush1.bf16.msra.mxu0 0
    %137 = vmatprep.subr.bf16.mxu0 0
    %138 = vmatpush1.bf16.msra.mxu0 0
    %139 = vmatprep.subr.bf16.mxu0 0
    %140 = vmatpush1.bf16.msra.mxu0 0
    %141 = vmatprep.subr.bf16.mxu0 0
    %142 = vmatpush1.bf16.msra.mxu0 0
    %143 = vmatprep.subr.bf16.mxu0 0
    %144 = vmatpush1.bf16.msra.mxu0 0
    %145 = vmatprep.subr.bf16.mxu0 0
    %146 = vmatpush1.bf16.msra.mxu0 0
    %147 = vmatprep.subr.bf16.mxu0 0
    %148 = vmatpush1.bf16.msra.mxu0 0
    %149 = vmatprep.subr.bf16.mxu0 0
    %150 = vmatpush1.bf16.msra.mxu0 0
    %151 = vmatprep.subr.bf16.mxu0 0
    %152 = vmatpush1.bf16.msra.mxu0 0
    %153 = vmatprep.subr.bf16.mxu0 0
    %154 = vmatpush1.bf16.msra.mxu0 0
    %155 = vmatprep.mubr.bf16.mxu0 0
    %156 = vmatmul.mubr.bf16.gmra.mrb[0].mxu0 %v121
    %v157 = vpop.f32.mrb[0].mxu0
    %v158 = vadd.f32 %v105, %v157
    %v159 = vpop.f32.mrb[0].mxu0
    %v160 = vpop.f32.mrb[0].mxu0
    %v161 = vpop.f32.mrb[0].mxu0
    %162 = vdwg.mxu0
    %v163 = vmax.f32 %v158, 0.0
    %v164 = vpack.c.bf16 %v163, %v163
    %v165 = vld [vmem:[%s3] sm:$0xf]
    %v166 = vld [vmem:[%s3 + $0x4] sm:$0xf]
    %v167 = vld [vmem:[%s3 + $0x8] sm:$0xf]
    %v168 = vld [vmem:[%s3 + $0xc] sm:$0xf]
    %v170 = vlaneseq
    %v171 = vshrl.u32 %v170, 7
    %v172 = vsub.s32 0, %v171
    %v173 = vrot.slane %v35, %v172
    %v179 = vunpack.c.l.b16 %v165
    %v180 = vunpack.c.l.b16 %v166
    %v181 = vunpack.c.l.b16 %v167
    %v182 = vunpack.c.l.b16 %v168
    %v183 = vpack.c.b16 %v180, %v179
    %v184 = vpack.c.b16 %v182, %v181
    %v188 = vsel %vm119, %v164, 0
    %190 = vmatprep.subr.bf16.mxu0 0
    %191 = vmatpush1.bf16.msra.mxu0 %v183
    %192 = vmatprep.subr.bf16.mxu0 0
    %193 = vmatpush1.bf16.msra.mxu0 %v184
    %194 = vmatprep.subr.bf16.mxu0 0
    %195 = vmatpush1.bf16.msra.mxu0 0
    %196 = vmatprep.subr.bf16.mxu0 0
    %197 = vmatpush1.bf16.msra.mxu0 0
    %198 = vmatprep.subr.bf16.mxu0 0
    %199 = vmatpush1.bf16.msra.mxu0 0
    %200 = vmatprep.subr.bf16.mxu0 0
    %201 = vmatpush1.bf16.msra.mxu0 0
    %202 = vmatprep.subr.bf16.mxu0 0
    %203 = vmatpush1.bf16.msra.mxu0 0
    %204 = vmatprep.subr.bf16.mxu0 0
    %205 = vmatpush1.bf16.msra.mxu0 0
    %206 = vmatprep.subr.bf16.mxu0 0
    %207 = vmatpush1.bf16.msra.mxu0 0
    %208 = vmatprep.subr.bf16.mxu0 0
    %209 = vmatpush1.bf16.msra.mxu0 0
    %210 = vmatprep.subr.bf16.mxu0 0
    %211 = vmatpush1.bf16.msra.mxu0 0
    %212 = vmatprep.subr.bf16.mxu0 0
    %213 = vmatpush1.bf16.msra.mxu0 0
    %214 = vmatprep.subr.bf16.mxu0 0
    %215 = vmatpush1.bf16.msra.mxu0 0
    %216 = vmatprep.subr.bf16.mxu0 0
    %217 = vmatpush1.bf16.msra.mxu0 0
    %218 = vmatprep.subr.bf16.mxu0 0
    %219 = vmatpush1.bf16.msra.mxu0 0
    %220 = vmatprep.subr.bf16.mxu0 0
    %221 = vmatpush1.bf16.msra.mxu0 0
    %222 = vmatprep.mubr.bf16.mxu0 0
    %223 = vmatmul.mubr.bf16.gmra.mrb[0].mxu0 %v188
    %v224 = vpop.f32.mrb[0].mxu0
    %v225 = vadd.f32 %v173, %v224
    %v226 = vpop.f32.mrb[0].mxu0
    %v227 = vpop.f32.mrb[0].mxu0
    %v228 = vpop.f32.mrb[0].mxu0
    %229 = vdwg.mxu0
    %vm230 = vcmask 31744
    %231 = vst.msk [vmem:[%s5] sm:$0xff] %vm230, %v225
    // Predicated region
    $region26: #{tpu_custom_call.1} parent=1 // pred_check
      _
    $region27: #{tpu_custom_call.1} parent=1 // pred_check_branch
      %233 = sbr.rel (0) target = $region29
    $region28: #{tpu_custom_call.1} parent=1 // pred_region
      _
    $region29: #{tpu_custom_call.1} parent=1 // pred_fallthru
      _
    // Predicated region
    $region30: #{tpu_custom_call.1} parent=1 // pred_check
      _
    $region31: #{tpu_custom_call.1} parent=1 // pred_check_branch
      %235 = sbr.rel (0) target = $region33
    $region32: #{tpu_custom_call.1} parent=1 // pred_region
      _
    $region33: #{tpu_custom_call.1} parent=1 // pred_fallthru
      _
    %236 = vsyncpa [#allocation3], 1

</llo_original>
